<compile_context>
chip_gen: v5e
topology: v5e:2x2
jax: 0.10.0
libtpu: 0.0.40
codegen_flags: <defaults>
</compile_context>

<pallas_src>
import functools

import jax
import jax.numpy as jnp
from jax.experimental import pallas as pl
from jax.experimental.pallas import tpu as pltpu


# --------------------------------- helpers ----------------------------------
def _fit_tile(dim, target, align=8):
    """Largest `align`-multiple tile <= target dividing dim, else the full dim
    (a full-extent block is always a legal BlockSpec shape)."""
    t = min(dim, target)
    t -= t % align
    while t >= align:
        if dim % t == 0:
            return t
        t -= align
    return dim


def _compiler_params(dimension_semantics):
    kwargs = dict(dimension_semantics=dimension_semantics)
    try:
        cap = int(pltpu.get_tpu_info().vmem_capacity_bytes)
        if cap >= 64 * 1024 * 1024:
            # leave headroom for Mosaic internal scratch / pipeline bookkeeping
            kwargs["vmem_limit_bytes"] = int(
                min(cap - 16 * 1024 * 1024, 100 * 1024 * 1024))
    except Exception:
        pass  # unknown chip: keep Mosaic defaults
    return pltpu.CompilerParams(**kwargs)


# ----------------------------- tiled matmul kernel --------------------------
def _matmul_kernel(x_ref, w_ref, o_ref, acc_ref, *, compute_dtype):
    @pl.when(pl.program_id(2) == 0)
    def _init():
        acc_ref[...] = jnp.zeros_like(acc_ref)

    a = x_ref[...]
    b = w_ref[...]
    if a.dtype != compute_dtype:
        a = a.astype(compute_dtype)
    if b.dtype != compute_dtype:
        b = b.astype(compute_dtype)
    acc_ref[...] += jnp.dot(a, b, preferred_element_type=jnp.float32)

    @pl.when(pl.program_id(2) == pl.num_programs(2) - 1)
    def _store():
        o_ref[...] = acc_ref[...].astype(o_ref.dtype)


def linear(x, w, *, out_dtype=None, compute_dtype=jnp.bfloat16,
           tm=256, tn=256, tk=256):
    """x:(M,K) @ w:(K,N) -> (M,N); bf16 MXU operands, f32 accumulation."""
    m, k = x.shape
    k2, n = w.shape
    assert k == k2
    out_dtype = x.dtype if out_dtype is None else out_dtype
    tm = _fit_tile(m, tm, 8)
    tn = _fit_tile(n, tn, 128)
    tk = _fit_tile(k, tk, 128)
    grid = (m // tm, n // tn, k // tk)
    bytes_accessed = (m * k * x.dtype.itemsize + k * n * w.dtype.itemsize
                      + m * n * jnp.dtype(out_dtype).itemsize)
    return pl.pallas_call(
        functools.partial(_matmul_kernel, compute_dtype=compute_dtype),
        out_shape=jax.ShapeDtypeStruct((m, n), out_dtype),
        grid=grid,
        in_specs=[
            pl.BlockSpec((tm, tk), lambda i, j, kk: (i, kk)),
            pl.BlockSpec((tk, tn), lambda i, j, kk: (kk, j)),
        ],
        out_specs=pl.BlockSpec((tm, tn), lambda i, j, kk: (i, j)),
        scratch_shapes=[pltpu.VMEM((tm, tn), jnp.float32)],
        compiler_params=_compiler_params(("parallel", "parallel", "arbitrary")),
        cost_estimate=pl.CostEstimate(flops=2 * m * n * k, transcendentals=0,
                                      bytes_accessed=int(bytes_accessed)),
    )(x, w)


# -------------------- RMS-norm + RoPE pre-pass (once per element) ------------
def _qk_norm_rope_kernel(q_ref, k_ref, cos_ref, sin_ref, qw_ref, kw_ref,
                         qo_ref, ko_ref, *, num_heads, num_kv_heads,
                         head_dim, eps):
    cos = cos_ref[...].astype(jnp.float32)            # (t, D)
    sin = sin_ref[...].astype(jnp.float32)            # (t, D) sign-folded
    qw = qw_ref[...].astype(jnp.float32)              # (1, D) includes 1/sqrt(D)
    kw = kw_ref[...].astype(jnp.float32)              # (1, D)

    def norm_rope(x, w):
        # RMS-norm in f32, then RoPE: rotate_half == roll(x, D/2) * sign-folded sin
        var = jnp.mean(x * x, axis=-1, keepdims=True)
        x = x * jax.lax.rsqrt(var + eps) * w
        return x * cos + pltpu.roll(x, head_dim // 2, 1) * sin

    for h in range(num_heads):
        s = h * head_dim
        x = q_ref[:, s:s + head_dim].astype(jnp.float32)
        qo_ref[:, s:s + head_dim] = norm_rope(x, qw).astype(qo_ref.dtype)
    for h in range(num_kv_heads):
        s = h * head_dim
        x = k_ref[:, s:s + head_dim].astype(jnp.float32)
        ko_ref[:, s:s + head_dim] = norm_rope(x, kw).astype(ko_ref.dtype)


def qk_norm_rope(q, k, cos, sin_folded, qw_scaled, kw, *, num_heads,
                 num_kv_heads, head_dim, eps, block=256,
                 out_dtype=jnp.bfloat16):
    b, s, hd = q.shape
    kvd = k.shape[-1]
    blk = _fit_tile(s, block, 8)
    grid = (b, s // blk)
    kern = functools.partial(_qk_norm_rope_kernel, num_heads=num_heads,
                             num_kv_heads=num_kv_heads, head_dim=head_dim,
                             eps=eps)
    return pl.pallas_call(
        kern,
        out_shape=(jax.ShapeDtypeStruct((b, s, hd), out_dtype),
                   jax.ShapeDtypeStruct((b, s, kvd), out_dtype)),
        grid=grid,
        in_specs=[
            pl.BlockSpec((None, blk, hd), lambda bi, i: (bi, i, 0)),
            pl.BlockSpec((None, blk, kvd), lambda bi, i: (bi, i, 0)),
            pl.BlockSpec((None, blk, head_dim), lambda bi, i: (bi, i, 0)),
            pl.BlockSpec((None, blk, head_dim), lambda bi, i: (bi, i, 0)),
            pl.BlockSpec((1, head_dim), lambda bi, i: (0, 0)),
            pl.BlockSpec((1, head_dim), lambda bi, i: (0, 0)),
        ],
        out_specs=[
            pl.BlockSpec((None, blk, hd), lambda bi, i: (bi, i, 0)),
            pl.BlockSpec((None, blk, kvd), lambda bi, i: (bi, i, 0)),
        ],
        compiler_params=_compiler_params(("parallel", "parallel")),
    )(q, k, cos, sin_folded, qw_scaled, kw)


# ------------------- flash attention (online softmax, GQA-stacked) ----------
def _flash_attention_kernel(q_ref, k_ref, v_ref, o_ref,
                            q_stack_ref, acc_ref, m_ref, l_ref,
                            *, num_heads, num_kv_heads, head_dim,
                            causal, block_q, block_k):
    qi = pl.program_id(1)
    ki = pl.program_id(2)
    groups = num_heads // num_kv_heads
    rows = groups * block_q

    # ---- init + GQA stacking once per q-tile (reused across the whole KV axis)
    @pl.when(ki == 0)
    def _init():
        m_ref[...] = jnp.full_like(m_ref, -jnp.inf)
        l_ref[...] = jnp.zeros_like(l_ref)
        acc_ref[...] = jnp.zeros_like(acc_ref)
        for kvh in range(num_kv_heads):
            for g in range(groups):
                h = kvh * groups + g
                q_stack_ref[kvh, g * block_q:(g + 1) * block_q, :] = (
                    q_ref[:, h * head_dim:(h + 1) * head_dim])

    def _compute():
        if causal:
            r = jax.lax.broadcasted_iota(jnp.int32, (rows, block_k), 0)
            c = jax.lax.broadcasted_iota(jnp.int32, (rows, block_k), 1)
            row = qi * block_q + (r % block_q)     # stacked row -> original q row
            col = ki * block_k + c
            mask = col <= row

        for kvh in range(num_kv_heads):
            ks = kvh * head_dim
            kh = k_ref[:, ks:ks + head_dim]        # (block_k, D) bf16
            vh = v_ref[:, ks:ks + head_dim]        # (block_k, D) bf16
            qs = q_stack_ref[kvh]                  # (G*block_q, D) bf16

            # one MXU push of K per kv head for the whole GQA group
            s = jax.lax.dot_general(qs, kh, (((1,), (1,)), ((), ())),
                                    preferred_element_type=jnp.float32)
            if causal:
                s = jnp.where(mask, s, -1e30)

            m_prev = m_ref[:, kvh:kvh + 1]         # (G*block_q, 1)
            l_prev = l_ref[:, kvh:kvh + 1]
            m_new = jnp.maximum(m_prev, jnp.max(s, axis=-1, keepdims=True))
            alpha = jnp.exp(m_prev - m_new)
            p = jnp.exp(s - m_new)
            l_ref[:, kvh:kvh + 1] = alpha * l_prev + jnp.sum(
                p, axis=-1, keepdims=True)
            m_ref[:, kvh:kvh + 1] = m_new

            pv = jnp.dot(p.astype(vh.dtype), vh,
                         preferred_element_type=jnp.float32)
            acc_ref[kvh] = alpha * acc_ref[kvh] + pv

    if causal:
        # skip compute for KV tiles entirely above the causal diagonal
        @pl.when(ki * block_k <= qi * block_q + block_q - 1)
        def _maybe():
            _compute()
    else:
        _compute()

    # ---- finalize: normalize and emit the lane-dense (block_q, H*D) slab -----
    @pl.when(ki == pl.num_programs(2) - 1)
    def _finalize():
        for kvh in range(num_kv_heads):
            inv_l = pl.reciprocal(l_ref[:, kvh:kvh + 1], approx=True)  # EUP slot
            normed = acc_ref[kvh] * inv_l                              # (G*bq, D)
            for g in range(groups):
                h = kvh * groups + g
                o_ref[:, h * head_dim:(h + 1) * head_dim] = (
                    normed[g * block_q:(g + 1) * block_q, :].astype(o_ref.dtype))


def flash_attention(q, k, v, *, num_heads, num_kv_heads, head_dim,
                    causal, block_q=256, block_k=256):
    b, s, hd = q.shape
    kvd = k.shape[-1]
    groups = num_heads // num_kv_heads
    block_q = _fit_tile(s, block_q, 8)
    block_k = _fit_tile(s, block_k, 8)
    grid = (b, s // block_q, s // block_k)

    if causal:
        def kv_index(bi, i, j):
            # clamp to the causal diagonal: fully-masked KV tiles map to the last
            # needed block -> same index as the previous step -> no extra DMA
            last = (i * block_q + block_q - 1) // block_k
            return (bi, jnp.minimum(j, last), 0)
    else:
        def kv_index(bi, i, j):
            return (bi, j, 0)

    kern = functools.partial(
        _flash_attention_kernel, num_heads=num_heads,
        num_kv_heads=num_kv_heads, head_dim=head_dim, causal=causal,
        block_q=block_q, block_k=block_k)

    itemsize = jnp.dtype(q.dtype).itemsize
    frac = 0.5 if causal else 1.0
    num_q_tiles = s // block_q
    cost = pl.CostEstimate(
        flops=int(4 * b * num_heads * s * s * head_dim * frac),
        transcendentals=int(b * num_heads * s * s * frac),
        bytes_accessed=int(itemsize * (2 * b * s * hd
                                       + 2 * b * s * kvd * num_q_tiles * frac)),
    )

    return pl.pallas_call(
        kern,
        out_shape=jax.ShapeDtypeStruct((b, s, hd), q.dtype),
        grid=grid,
        in_specs=[
            # q: one q-tile, ALL heads, lane-dense, reused across the KV axis
            pl.BlockSpec((None, block_q, hd), lambda bi, i, j: (bi, i, 0)),
            # k/v: one KV-tile, ALL kv heads; causal-clamped index map
            pl.BlockSpec((None, block_k, kvd), kv_index),
            pl.BlockSpec((None, block_k, kvd), kv_index),
        ],
        out_specs=pl.BlockSpec((None, block_q, hd), lambda bi, i, j: (bi, i, 0)),
        scratch_shapes=[
            # GQA-stacked Q (relayout once per q tile)
            pltpu.VMEM((num_kv_heads, groups * block_q, head_dim), q.dtype),
            # f32 output accumulator, stacked layout
            pltpu.VMEM((num_kv_heads, groups * block_q, head_dim), jnp.float32),
            # running max / denom, lane-packed across kv heads
            pltpu.VMEM((groups * block_q, num_kv_heads), jnp.float32),
            pltpu.VMEM((groups * block_q, num_kv_heads), jnp.float32),
        ],
        compiler_params=_compiler_params(("parallel", "parallel", "arbitrary")),
        cost_estimate=cost,
    )(q, k, v)


# ------------------------------ forward wrapper -----------------------------
def self_attention_forward(x, params, cos, sin, *, num_heads, num_kv_heads,
                           head_dim, eps, block_q=256, block_k=256,
                           compute_dtype=jnp.bfloat16):
    b, s, hidden = x.shape
    hd = num_heads * head_dim
    kvd = num_kv_heads * head_dim

    # fused QKV projection: x read from HBM once, bf16 intermediates
    w_qkv = jnp.concatenate([params["wq"], params["wk"], params["wv"]], axis=1)
    x2d = x.reshape(b * s, hidden)
    qkv = linear(x2d, w_qkv, out_dtype=compute_dtype, compute_dtype=compute_dtype)
    q = qkv[:, :hd].reshape(b, s, hd)
    k = qkv[:, hd:hd + kvd].reshape(b, s, kvd)
    v = qkv[:, hd + kvd:].reshape(b, s, kvd)

    # sign-fold sin so rotate_half(x)*sin == roll(x, D/2)*(sign*sin);
    # fold 1/sqrt(D) into the q-norm weight (RoPE is linear).
    half = head_dim // 2
    sign = jnp.concatenate([-jnp.ones((half,), cos.dtype),
                            jnp.ones((half,), cos.dtype)])
    sin_folded = sin * sign
    qw_scaled = (params["q_norm_w"] * (head_dim ** -0.5)).reshape(1, head_dim)
    kw = params["k_norm_w"].reshape(1, head_dim)

    # RMS-norm + RoPE exactly once per q/k element (no recompute in attention)
    q_r, k_r = qk_norm_rope(q, k, cos, sin_folded, qw_scaled, kw,
                            num_heads=num_heads, num_kv_heads=num_kv_heads,
                            head_dim=head_dim, eps=eps, out_dtype=compute_dtype)

    causal = s > 1  # matches is_causal = q.shape[2] > 1 in the PyTorch module
    attn = flash_attention(q_r, k_r, v, num_heads=num_heads,
                           num_kv_heads=num_kv_heads, head_dim=head_dim,
                           causal=causal, block_q=block_q, block_k=block_k)

    # (B,S,H*D) -> (B*S,H*D) is free; o_proj emits the model dtype
    out = linear(attn.reshape(b * s, hd), params["wo"],
                 out_dtype=x.dtype, compute_dtype=compute_dtype)
    return out.reshape(b, s, hidden)


# --------------------------- pure-JAX reference -----------------------------
def reference_forward(x, params, cos, sin, *, num_heads, num_kv_heads,
                      head_dim, eps):
    b, s, hidden = x.shape
    groups = num_heads // num_kv_heads

    def rms(t, w):
        var = jnp.mean(t.astype(jnp.float32) ** 2, axis=-1, keepdims=True)
        return w * (t * jax.lax.rsqrt(var + eps))

    q = (x @ params["wq"]).reshape(b, s, num_heads, head_dim)
    k = (x @ params["wk"]).reshape(b, s, num_kv_heads, head_dim)
    v = (x @ params["wv"]).reshape(b, s, num_kv_heads, head_dim)
    q = rms(q, params["q_norm_w"]).transpose(0, 2, 1, 3)
    k = rms(k, params["k_norm_w"]).transpose(0, 2, 1, 3)
    v = v.transpose(0, 2, 1, 3)

    def rope(t):
        c, sn = cos[:, None], sin[:, None]
        half = head_dim // 2
        t1, t2 = t[..., :half], t[..., half:]
        rot = jnp.concatenate([-t2, t1], axis=-1)
        return t * c + rot * sn

    q, k = rope(q), rope(k)
    k = jnp.repeat(k, groups, axis=1)
    v = jnp.repeat(v, groups, axis=1)

    scale = head_dim ** -0.5
    scores = jnp.einsum("bhqd,bhkd->bhqk", q, k) * scale
    mask = jnp.tril(jnp.ones((s, s), dtype=bool))
    scores = jnp.where(mask, scores, -1e30)
    p = jax.nn.softmax(scores, axis=-1)
    o = jnp.einsum("bhqk,bhkd->bhqd", p, v)
    o = o.transpose(0, 2, 1, 3).reshape(b, s, num_heads * head_dim)
    return o @ params["wo"]


# --------------------------------- main --------------------------------------
if __name__ == "__main__":
    B, S, HIDDEN = 2, 64, 128
    HEAD_DIM, NUM_HEADS, NUM_KV_HEADS = 128, 4, 2
    EPS = 1e-6

    key = jax.random.PRNGKey(0)
    kx, kq, kk, kv, ko, kqn, kkn = jax.random.split(key, 7)

    x = jax.random.normal(kx, (B, S, HIDDEN), dtype=jnp.float32)
    params = {
        # stored as (in, out) so the kernels compute x @ W directly
        "wq": 0.05 * jax.random.normal(kq, (HIDDEN, NUM_HEADS * HEAD_DIM), jnp.float32),
        "wk": 0.05 * jax.random.normal(kk, (HIDDEN, NUM_KV_HEADS * HEAD_DIM), jnp.float32),
        "wv": 0.05 * jax.random.normal(kv, (HIDDEN, NUM_KV_HEADS * HEAD_DIM), jnp.float32),
        "wo": 0.05 * jax.random.normal(ko, (NUM_HEADS * HEAD_DIM, HIDDEN), jnp.float32),
        "q_norm_w": 1.0 + 0.1 * jax.random.normal(kqn, (HEAD_DIM,), jnp.float32),
        "k_norm_w": 1.0 + 0.1 * jax.random.normal(kkn, (HEAD_DIM,), jnp.float32),
    }

    # rotary position embeddings: cos/sin of shape (B, S, HEAD_DIM)
    pos = jnp.arange(S, dtype=jnp.float32)
    inv_freq = 1.0 / (10000.0 ** (jnp.arange(0, HEAD_DIM, 2, jnp.float32) / HEAD_DIM))
    freqs = pos[:, None] * inv_freq[None, :]
    emb = jnp.concatenate([freqs, freqs], axis=-1)
    cos = jnp.tile(jnp.cos(emb)[None], (B, 1, 1))
    sin = jnp.tile(jnp.sin(emb)[None], (B, 1, 1))

    # small blocks so S=64 exercises multi-tile online softmax, the causal
    # compute-skip and the causal DMA-clamp (grid = (B, 2, 2)).
    out = self_attention_forward(
        x, params, cos, sin,
        num_heads=NUM_HEADS, num_kv_heads=NUM_KV_HEADS,
        head_dim=HEAD_DIM, eps=EPS, block_q=32, block_k=32)
    out = jax.block_until_ready(out)

    ref = reference_forward(
        x, params, cos, sin,
        num_heads=NUM_HEADS, num_kv_heads=NUM_KV_HEADS,
        head_dim=HEAD_DIM, eps=EPS)

    assert out.shape == (B, S, HIDDEN)
    # tolerance covers bf16 MXU operands + approx reciprocal (f32 accumulation)
    rel = float(jnp.linalg.norm((out - ref).astype(jnp.float32))
                / jnp.linalg.norm(ref.astype(jnp.float32)))
    assert rel < 5e-2, f"relative error {rel}"

    # TODO(synk): KV-cache path (cache.update_and_concat) not modeled; cache=None only.
    print("KERNEL_OK")
</pallas_src>

<mosaic_0001>
module attributes {stable_mosaic.version = 11 : i64} {
  func.func @_matmul_kernel(%arg0: i32, %arg1: i32, %arg2: i32, %arg3: memref<128x128xf32, #tpu.memory_space<vmem>>, %arg4: memref<128x256xf32, #tpu.memory_space<vmem>>, %arg5: memref<128x256xbf16, #tpu.memory_space<vmem>>, %arg6: memref<128x256xf32, #tpu.memory_space<vmem>>) attributes {dimension_semantics = [#tpu.dimension_semantics<parallel>, #tpu.dimension_semantics<parallel>, #tpu.dimension_semantics<arbitrary>], iteration_bounds = array<i64: 1, 4, 1>, scalar_prefetch = 0 : i64, scratch_operands = 1 : i64, tpu.core_type = #tpu.core_type<tc>, window_params = [{transform_indices = @transform_0, window_bounds = array<i64: 128, 128>}, {transform_indices = @transform_1, window_bounds = array<i64: 128, 256>}, {transform_indices = @transform_2, window_bounds = array<i64: 128, 256>}]} {
    %c0_i32 = arith.constant 0 : i32
    %0 = arith.cmpi eq, %arg2, %c0_i32 : i32
    %1 = arith.extui %0 : i1 to i32
    %c0_i32_0 = arith.constant 0 : i32
    %2 = arith.cmpi ne, %1, %c0_i32_0 : i32
    scf.if %2 {
      %cst_10 = arith.constant 0.000000e+00 : f32
      %14 = vector.broadcast %cst_10 : f32 to vector<128x256xf32>
      %c0_11 = arith.constant 0 : index
      %c0_12 = arith.constant 0 : index
      %15 = vector.load %arg6[%c0_11, %c0_12] : memref<128x256xf32, #tpu.memory_space<vmem>>, vector<128x256xf32>
      tpu.vector_store %arg6[%c0_11, %c0_12], %14 {strides = array<i32>} : memref<128x256xf32, #tpu.memory_space<vmem>>, vector<128x256xf32>,
    } else {
    }
    %c0 = arith.constant 0 : index
    %c0_1 = arith.constant 0 : index
    %3 = vector.load %arg3[%c0, %c0_1] : memref<128x128xf32, #tpu.memory_space<vmem>>, vector<128x128xf32>
    %c0_2 = arith.constant 0 : index
    %c0_3 = arith.constant 0 : index
    %4 = vector.load %arg4[%c0_2, %c0_3] : memref<128x256xf32, #tpu.memory_space<vmem>>, vector<128x256xf32>
    %5 = arith.truncf %3 : vector<128x128xf32> to vector<128x128xbf16>
    %6 = arith.truncf %4 : vector<128x256xf32> to vector<128x256xbf16>
    %c0_4 = arith.constant 0 : index
    %c0_5 = arith.constant 0 : index
    %7 = vector.load %arg6[%c0_4, %c0_5] : memref<128x256xf32, #tpu.memory_space<vmem>>, vector<128x256xf32>
    %cst = arith.constant dense<0.000000e+00> : vector<128x256xf32>
    %8 = tpu.matmul %5, %6, %cst {dimension_numbers = #tpu.dot_dimension_numbers<[1], [0], [0], [1], [0, 0, 1, 1], [], []>} : vector<128x128xbf16>, vector<128x256xbf16>, vector<128x256xf32> -> vector<128x256xf32>
    %9 = arith.addf %7, %8 : vector<128x256xf32>
    %c0_6 = arith.constant 0 : index
    %c0_7 = arith.constant 0 : index
    %10 = vector.load %arg6[%c0_6, %c0_7] : memref<128x256xf32, #tpu.memory_space<vmem>>, vector<128x256xf32>
    tpu.vector_store %arg6[%c0_6, %c0_7], %9 {strides = array<i32>} : memref<128x256xf32, #tpu.memory_space<vmem>>, vector<128x256xf32>,
    %c0_i32_8 = arith.constant 0 : i32
    %11 = arith.cmpi eq, %arg2, %c0_i32_8 : i32
    %12 = arith.extui %11 : i1 to i32
    %c0_i32_9 = arith.constant 0 : i32
    %13 = arith.cmpi ne, %12, %c0_i32_9 : i32
    scf.if %13 {
      %c0_10 = arith.constant 0 : index
      %c0_11 = arith.constant 0 : index
      %14 = vector.load %arg6[%c0_10, %c0_11] : memref<128x256xf32, #tpu.memory_space<vmem>>, vector<128x256xf32>
      %15 = arith.truncf %14 : vector<128x256xf32> to vector<128x256xbf16>
      %c0_12 = arith.constant 0 : index
      %c0_13 = arith.constant 0 : index
      %16 = vector.load %arg5[%c0_12, %c0_13] : memref<128x256xbf16, #tpu.memory_space<vmem>>, vector<128x256xbf16>
      tpu.vector_store %arg5[%c0_12, %c0_13], %15 {strides = array<i32>} : memref<128x256xbf16, #tpu.memory_space<vmem>>, vector<128x256xbf16>,
    } else {
    }
    return
  }
  func.func @transform_0(%arg0: i32, %arg1: i32, %arg2: i32) -> (i32, i32) {
    %c0_i32 = arith.constant 0 : i32
    return %arg0, %arg2 : i32, i32
  }
  func.func @transform_1(%arg0: i32, %arg1: i32, %arg2: i32) -> (i32, i32) {
    %c0_i32 = arith.constant 0 : i32
    return %arg2, %arg1 : i32, i32
  }
  func.func @transform_2(%arg0: i32, %arg1: i32, %arg2: i32) -> (i32, i32) {
    %c0_i32 = arith.constant 0 : i32
    return %arg0, %arg1 : i32, i32
  }
}

</mosaic_0001>

<llo_original>
// kernel: tpu_custom_call.1
$region0: #{tpu_custom_call.1}
  #allocation0 [shape = 'u32[]', space=smem, size = 0x4, offset = 0x4, fixed_abs, tag = 'smem constant byte address 0x4 - core index']
  #allocation1 [shape = 'u32[72,128]{1,0:T(1,128)}', space=vmem, size = 0x9000, scoped, tag = 'internal scratch']
  #allocation2 [shape = 'f32[128,256]{1,0:T(8,128)}', space=vmem, size = 0x20000, scoped, tag = 'scratch operand']
  %s0 = inlined_call_operand.hbm [shape: f32[128,128], index: 0, kind: input, shape index: {}]
  %s1 = inlined_call_operand.hbm [shape: f32[128,1024], index: 1, kind: input, shape index: {}]
  %s2 = inlined_call_operand.hbm [shape: bf16[128,1024], index: 2, kind: output, shape index: {}]
  %s3 = sld [smem:[#allocation0]]
  $region57: #{tpu_custom_call.1} parent=0
    _
  %s5 = ssub.s32 1, %s3
  %s6 = scalar_select 0, %s5, %s3
  $region1: #{tpu_custom_call.1} parent=0
    #allocation3 [shape = 'u8[65536]{0}', space=vmem, size = 0x10000, scoped, tag = 'input window, operand 0, single buffered']
    #allocation4 [shape = 's32[2]{0}', space=sflag, size = 0x8, scoped, tag = 'scoped memory for tpu_custom_call.1']
    #allocation5 [shape = 's32[2]{0}', space=sflag, size = 0x8, scoped, tag = 'scoped memory for tpu_custom_call.1']
    #allocation6 [shape = 'u8[262144]{0}', space=vmem, size = 0x40000, scoped, tag = 'input window, operand 1']
    #allocation7 [shape = 's32[2]{0}', space=sflag, size = 0x8, scoped, tag = 'scoped memory for tpu_custom_call.1']
    #allocation8 [shape = 'u8[131072]{0}', space=vmem, size = 0x20000, scoped, tag = 'output window, operand 0']
    %7 = vsyncpa [#allocation4], 0
    %8 = vsyncpa [#allocation7], 0
    %s9 = scalar_lea.sflag [#allocation7], 1
    %10 = vsyncpa %s9, 0
    %11 = vsyncpa [#allocation5], 0
    %s12 = scalar_lea.sflag [#allocation5], 1
    %13 = vsyncpa %s12, 0
    loop: start=0, step=1, limit=6
    $region2: #{tpu_custom_call.1} parent=1 // loop_pre_header
      _
    $region3: #{tpu_custom_call.1} parent=1 // loop_header
      %s15 = sphi 0, %s19
      %p16 = scmp.ge.s32.totalorder %s15, 6
      %s22 = sphi 0, %s41
      %s23 = sphi 0, %s37
      %s24 = sphi 0, %s33
      %s25 = sphi 0, %s22
      %s26 = sphi 0, %s23
      %s27 = sphi 0, %s24
      %s28 = sphi 0, %s25
      %s29 = sphi 0, %s26
      %s30 = sphi 0, %s27
      %s46 = sphi 0, %s48
      %s49 = sphi 0, %s46
      %s50 = sphi 0, %s49
      %s66 = sphi 0, %s50
      %s74 = sphi 0, %s76
      %s77 = sphi 0, %s74
      %s78 = sphi 0, %s77
      %s94 = sphi 0, %s78
      %s102 = sphi 0, %s104
      %s105 = sphi 0, %s102
      %s106 = sphi 0, %s105
      %s122 = sphi 0, %s106
    $region4: #{tpu_custom_call.1} parent=1 // loop_header_branch
      %18 = sbr.rel (%p16) target = $region8
    $region5: #{tpu_custom_call.1} parent=1 // loop_body
      %s20 = ssub.s32 %s15, 1
      %s21 = ssub.s32 %s15, 2
      %s31 = sadd.s32 1, %s24
      %p32 = scmp.ge.s32.totalorder %s31, 1
      %s33 = scalar_select %p32, 0, %s31
      %s34 = sadd.s32 1, %s23
      %s35 = scalar_select %p32, %s34, %s23
      %p36 = scmp.ge.s32.totalorder %s35, 4
      %s37 = scalar_select %p36, 0, %s35
      %s38 = sadd.s32 1, %s22
      %s39 = scalar_select %p36, %s38, %s22
      %p40 = scmp.ge.s32.totalorder %s39, 1
      %s41 = scalar_select %p40, 0, %s39
      %s42 = ssub.s32 %s22, %s41
      %s43 = ssub.s32 %s24, %s33
      %s44 = sor.u32 %s42, %s43
      %p45 = scmp.eq.s32.totalorder %s44, 0
      %s47 = sadd.s32 %s46, 1
      %s48 = scalar_select %p45, %s46, %s47
      %p51 = pneg %p45
      %p52 = scmp.eq.s32.totalorder %s15, 3
      %p53 = por %p51, %p52
      %p54 = scmp.ne.s32.totalorder %s46, %s49
      %p55 = scmp.eq.s32.totalorder %s15, 0
      %p56 = por %p54, %p55
      %p57 = scmp.ne.s32.totalorder %s46, %s49
      %p58 = scmp.eq.s32.totalorder %s20, 3
      %p59 = por %p57, %p58
      %p60 = scmp.ne.s32.totalorder %s49, %s50
      %p61 = scmp.eq.s32.totalorder %s20, 0
      %p62 = por %p60, %p61
      %p63 = scmp.ne.s32.totalorder %s49, %s50
      %p64 = scmp.eq.s32.totalorder %s21, 3
      %p65 = por %p63, %p64
      %p67 = scmp.ne.s32.totalorder %s50, %s66
      %p68 = scmp.eq.s32.totalorder %s21, 0
      %p69 = por %p67, %p68
      %s70 = ssub.s32 %s24, %s33
      %s71 = ssub.s32 %s23, %s37
      %s72 = sor.u32 %s70, %s71
      %p73 = scmp.eq.s32.totalorder %s72, 0
      %s75 = sadd.s32 %s74, 1
      %s76 = scalar_select %p73, %s74, %s75
      %p79 = pneg %p73
      %p80 = scmp.eq.s32.totalorder %s15, 3
      %p81 = por %p79, %p80
      %p82 = scmp.ne.s32.totalorder %s74, %s77
      %p83 = scmp.eq.s32.totalorder %s15, 0
      %p84 = por %p82, %p83
      %p85 = scmp.ne.s32.totalorder %s74, %s77
      %p86 = scmp.eq.s32.totalorder %s20, 3
      %p87 = por %p85, %p86
      %p88 = scmp.ne.s32.totalorder %s77, %s78
      %p89 = scmp.eq.s32.totalorder %s20, 0
      %p90 = por %p88, %p89
      %p91 = scmp.ne.s32.totalorder %s77, %s78
      %p92 = scmp.eq.s32.totalorder %s21, 3
      %p93 = por %p91, %p92
      %p95 = scmp.ne.s32.totalorder %s78, %s94
      %p96 = scmp.eq.s32.totalorder %s21, 0
      %p97 = por %p95, %p96
      %s98 = ssub.s32 %s22, %s41
      %s99 = ssub.s32 %s23, %s37
      %s100 = sor.u32 %s98, %s99
      %p101 = scmp.eq.s32.totalorder %s100, 0
      %s103 = sadd.s32 %s102, 1
      %s104 = scalar_select %p101, %s102, %s103
      %p107 = pneg %p101
      %p108 = scmp.eq.s32.totalorder %s15, 3
      %p109 = por %p107, %p108
      %p110 = scmp.ne.s32.totalorder %s102, %s105
      %p111 = scmp.eq.s32.totalorder %s15, 0
      %p112 = por %p110, %p111
      %p113 = scmp.ne.s32.totalorder %s102, %s105
      %p114 = scmp.eq.s32.totalorder %s20, 3
      %p115 = por %p113, %p114
      %p116 = scmp.ne.s32.totalorder %s105, %s106
      %p117 = scmp.eq.s32.totalorder %s20, 0
      %p118 = por %p116, %p117
      %p119 = scmp.ne.s32.totalorder %s105, %s106
      %p120 = scmp.eq.s32.totalorder %s21, 3
      %p121 = por %p119, %p120
      %p123 = scmp.ne.s32.totalorder %s106, %s122
      %p124 = scmp.eq.s32.totalorder %s21, 0
      %p125 = por %p123, %p124
      %p126 = scmp.le.s32.totalorder 1, %s15
      %p127 = scmp.lt.s32.totalorder %s15, 5
      %p128 = pnand %p126, %p127
      %p129 = pneg %p128
      // Predicated region
      $region9: #{tpu_custom_call.1} parent=5 // pred_check
        _
      $region10: #{tpu_custom_call.1} parent=5 // pred_check_branch
        %131 = sbr.rel (%p128) target = $region12
      $region11: #{tpu_custom_call.1} parent=5 // pred_region
        %s132 = ssub.s32 %s15, 1
        // Predicated region
        $region13: #{tpu_custom_call.1} parent=11 // pred_check
          %p133 = pneg %p62
        $region14: #{tpu_custom_call.1} parent=11 // pred_check_branch
          %135 = sbr.rel (%p133) target = $region16
        $region15: #{tpu_custom_call.1} parent=11 // pred_region
          %s136 = smul.u32 16, %s25
          %138 = vsyncadd [#allocation4], 0
          %s139 = sadd.s32 %s27, %s136
          %s140 = smul.addr %s139, 8
          %s141 = scalar_lea.hbm %s0, %s140
          %s142 = sshll.u32 %s141, 4
          %s143 = int_to_ptr.hbm [resolvable:$true] %s142
          %s144 = sshll.u32 [#allocation3], 4
          %s145 = int_to_ptr.vmem [resolvable:$true] %s144
          %150 = dma.hbm_to_vmem [thread:$0]  %s143, 2048, %s145, [#allocation4], 128, 128, 8
        $region16: #{tpu_custom_call.1} parent=11 // pred_fallthru
          _
      $region12: #{tpu_custom_call.1} parent=5 // pred_fallthru
        _
      %p151 = scmp.lt.s32.totalorder %s15, 4
      // Predicated region
      $region17: #{tpu_custom_call.1} parent=5 // pred_check
        %p152 = pneg %p151
      $region18: #{tpu_custom_call.1} parent=5 // pred_check_branch
        %154 = sbr.rel (%p152) target = $region20
      $region19: #{tpu_custom_call.1} parent=5 // pred_region
        // Predicated region
        $region21: #{tpu_custom_call.1} parent=19 // pred_check
          %p155 = pneg %p84
        $region22: #{tpu_custom_call.1} parent=19 // pred_check_branch
          %157 = sbr.rel (%p155) target = $region24
        $region23: #{tpu_custom_call.1} parent=19 // pred_region
          %s158 = sand.u32 %s74, 1
          %s159 = scalar_lea.sflag [#allocation7], %s158
          %s160 = sand.u32 %s74, 1
          %s161 = smul.addr %s160, 256
          %s162 = scalar_lea.vmem [#allocation6], %s161
          %s163 = smul.u32 16, %s24
          %s164 = smul.u32 2, %s23
          %166 = vsyncadd %s159, 0
          %s167 = smul.addr %s163, 8
          %s168 = sadd.s32 %s164, %s167
          %s169 = smul.addr %s168, 8
          %s170 = scalar_lea.hbm %s1, %s169
          %s171 = sshll.u32 %s170, 4
          %s172 = int_to_ptr.hbm [resolvable:$true] %s171
          %s173 = sshll.u32 %s162, 4
          %s174 = int_to_ptr.vmem [resolvable:$true] %s173
          %179 = dma.hbm_to_vmem [thread:$0]  %s172, 4096, %s174, %s159, 1024, 256, 16
        $region24: #{tpu_custom_call.1} parent=19 // pred_fallthru
          _
      $region20: #{tpu_custom_call.1} parent=5 // pred_fallthru
        _
      %p180 = scmp.le.s32.totalorder 1, %s15
      %p181 = scmp.lt.s32.totalorder %s15, 5
      %p182 = pnand %p180, %p181
      %p183 = pneg %p182
      // Predicated region
      $region25: #{tpu_custom_call.1} parent=5 // pred_check
        _
      $region26: #{tpu_custom_call.1} parent=5 // pred_check_branch
        %185 = sbr.rel (%p182) target = $region28
      $region27: #{tpu_custom_call.1} parent=5 // pred_region
        %s186 = ssub.s32 %s15, 1
        // Predicated region
        $region29: #{tpu_custom_call.1} parent=27 // pred_check
          %p187 = pneg %p62
        $region30: #{tpu_custom_call.1} parent=27 // pred_check_branch
          %189 = sbr.rel (%p187) target = $region32
        $region31: #{tpu_custom_call.1} parent=27 // pred_region
          %191 = dma.done [#allocation4], 2048
        $region32: #{tpu_custom_call.1} parent=27 // pred_fallthru
          _
        %s192 = sand.u32 %s77, 1
        %s193 = scalar_lea.sflag [#allocation7], %s192
        %s194 = sand.u32 %s77, 1
        %s195 = smul.addr %s194, 256
        %s196 = scalar_lea.vmem [#allocation6], %s195
        // Predicated region
        $region33: #{tpu_custom_call.1} parent=27 // pred_check
          %p197 = pneg %p90
        $region34: #{tpu_custom_call.1} parent=27 // pred_check_branch
          %199 = sbr.rel (%p197) target = $region36
        $region35: #{tpu_custom_call.1} parent=27 // pred_region
          %201 = dma.done %s193, 4096
        $region36: #{tpu_custom_call.1} parent=27 // pred_fallthru
          _
        %p202 = pneg %p62
        %p203 = pneg %p59
        %s204 = sand.u32 %s77, 1
        %s205 = scalar_lea.sflag [#allocation7], %s204
        %s206 = sand.u32 %s77, 1
        %s207 = smul.addr %s206, 256
        %s208 = scalar_lea.vmem [#allocation6], %s207
        %p209 = pneg %p90
        %p210 = pneg %p87
        %p211 = pneg %p118
        %p212 = pneg %p115
        %s213 = sand.u32 %s105, 1
        %s214 = scalar_lea.sflag [#allocation5], %s213
        %s215 = sand.u32 %s105, 1
        %s216 = smul.addr %s215, 128
        %s217 = scalar_lea.vmem [#allocation8], %s216
        %s218 = smul.u32 16, %s25
        %s219 = smul.u32 16, %s27
        %s220 = smul.u32 2, %s26
        %s221 = smul.u32 16, %s25
        %s222 = smul.u32 2, %s26
        %p223 = scmp.eq.s32.totalorder %s27, 0
        // Predicated region
        $region37: #{tpu_custom_call.1} parent=27 // pred_check
          %p224 = pneg %p223
        $region38: #{tpu_custom_call.1} parent=27 // pred_check_branch
          %226 = sbr.rel (%p224) target = $region40
        $region39: #{tpu_custom_call.1} parent=27 // pred_region
          %227 = vst [vmem:[#allocation2] sm:$0xff] 0.0
          %228 = vst [vmem:[#allocation2 + $0x8] sm:$0xff] 0.0
          %229 = vst [vmem:[#allocation2 + $0x10] sm:$0xff] 0.0
          %230 = vst [vmem:[#allocation2 + $0x18] sm:$0xff] 0.0
          %231 = vst [vmem:[#allocation2 + $0x20] sm:$0xff] 0.0
          %232 = vst [vmem:[#allocation2 + $0x28] sm:$0xff] 0.0
          %233 = vst [vmem:[#allocation2 + $0x30] sm:$0xff] 0.0
          %234 = vst [vmem:[#allocation2 + $0x38] sm:$0xff] 0.0
          %235 = vst [vmem:[#allocation2 + $0x40] sm:$0xff] 0.0
          %236 = vst [vmem:[#allocation2 + $0x48] sm:$0xff] 0.0
          %237 = vst [vmem:[#allocation2 + $0x50] sm:$0xff] 0.0
          %238 = vst [vmem:[#allocation2 + $0x58] sm:$0xff] 0.0
          %239 = vst [vmem:[#allocation2 + $0x60] sm:$0xff] 0.0
          %240 = vst [vmem:[#allocation2 + $0x68] sm:$0xff] 0.0
          %241 = vst [vmem:[#allocation2 + $0x70] sm:$0xff] 0.0
          %242 = vst [vmem:[#allocation2 + $0x78] sm:$0xff] 0.0
          %243 = vst [vmem:[#allocation2 + $0x80] sm:$0xff] 0.0
          %244 = vst [vmem:[#allocation2 + $0x88] sm:$0xff] 0.0
          %245 = vst [vmem:[#allocation2 + $0x90] sm:$0xff] 0.0
          %246 = vst [vmem:[#allocation2 + $0x98] sm:$0xff] 0.0
          %247 = vst [vmem:[#allocation2 + $0xa0] sm:$0xff] 0.0
          %248 = vst [vmem:[#allocation2 + $0xa8] sm:$0xff] 0.0
          %249 = vst [vmem:[#allocation2 + $0xb0] sm:$0xff] 0.0
          %250 = vst [vmem:[#allocation2 + $0xb8] sm:$0xff] 0.0
          %251 = vst [vmem:[#allocation2 + $0xc0] sm:$0xff] 0.0
          %252 = vst [vmem:[#allocation2 + $0xc8] sm:$0xff] 0.0
          %253 = vst [vmem:[#allocation2 + $0xd0] sm:$0xff] 0.0
          %254 = vst [vmem:[#allocation2 + $0xd8] sm:$0xff] 0.0
          %255 = vst [vmem:[#allocation2 + $0xe0] sm:$0xff] 0.0
          %256 = vst [vmem:[#allocation2 + $0xe8] sm:$0xff] 0.0
          %257 = vst [vmem:[#allocation2 + $0xf0] sm:$0xff] 0.0
          %258 = vst [vmem:[#allocation2 + $0xf8] sm:$0xff] 0.0
        $region40: #{tpu_custom_call.1} parent=27 // pred_fallthru
          _
        %v259 = vld [vmem:[#allocation3] sm:$0xff]
        %v260 = vld [vmem:[#allocation3 + $0x8] sm:$0xff]
        %v261 = vld [vmem:[#allocation3 + $0x10] sm:$0xff]
        %v262 = vld [vmem:[#allocation3 + $0x18] sm:$0xff]
        %v263 = vld [vmem:[#allocation3 + $0x20] sm:$0xff]
        %v264 = vld [vmem:[#allocation3 + $0x28] sm:$0xff]
        %v265 = vld [vmem:[#allocation3 + $0x30] sm:$0xff]
        %v266 = vld [vmem:[#allocation3 + $0x38] sm:$0xff]
        %v267 = vld [vmem:[#allocation3 + $0x40] sm:$0xff]
        %v268 = vld [vmem:[#allocation3 + $0x48] sm:$0xff]
        %v269 = vld [vmem:[#allocation3 + $0x50] sm:$0xff]
        %v270 = vld [vmem:[#allocation3 + $0x58] sm:$0xff]
        %v271 = vld [vmem:[#allocation3 + $0x60] sm:$0xff]
        %v272 = vld [vmem:[#allocation3 + $0x68] sm:$0xff]
        %v273 = vld [vmem:[#allocation3 + $0x70] sm:$0xff]
        %v274 = vld [vmem:[#allocation3 + $0x78] sm:$0xff]
        %v275 = vld [vmem:[%s196] sm:$0xff]
        %v276 = vld [vmem:[%s196 + $0x8] sm:$0xff]
        %v277 = vld [vmem:[%s196 + $0x10] sm:$0xff]
        %v278 = vld [vmem:[%s196 + $0x18] sm:$0xff]
        %v279 = vld [vmem:[%s196 + $0x20] sm:$0xff]
        %v280 = vld [vmem:[%s196 + $0x28] sm:$0xff]
        %v281 = vld [vmem:[%s196 + $0x30] sm:$0xff]
        %v282 = vld [vmem:[%s196 + $0x38] sm:$0xff]
        %v283 = vld [vmem:[%s196 + $0x40] sm:$0xff]
        %v284 = vld [vmem:[%s196 + $0x48] sm:$0xff]
        %v285 = vld [vmem:[%s196 + $0x50] sm:$0xff]
        %v286 = vld [vmem:[%s196 + $0x58] sm:$0xff]
        %v287 = vld [vmem:[%s196 + $0x60] sm:$0xff]
        %v288 = vld [vmem:[%s196 + $0x68] sm:$0xff]
        %v289 = vld [vmem:[%s196 + $0x70] sm:$0xff]
        %v290 = vld [vmem:[%s196 + $0x78] sm:$0xff]
        %v291 = vld [vmem:[%s196 + $0x80] sm:$0xff]
        %v292 = vld [vmem:[%s196 + $0x88] sm:$0xff]
        %v293 = vld [vmem:[%s196 + $0x90] sm:$0xff]
        %v294 = vld [vmem:[%s196 + $0x98] sm:$0xff]
        %v295 = vld [vmem:[%s196 + $0xa0] sm:$0xff]
        %v296 = vld [vmem:[%s196 + $0xa8] sm:$0xff]
        %v297 = vld [vmem:[%s196 + $0xb0] sm:$0xff]
        %v298 = vld [vmem:[%s196 + $0xb8] sm:$0xff]
        %v299 = vld [vmem:[%s196 + $0xc0] sm:$0xff]
        %v300 = vld [vmem:[%s196 + $0xc8] sm:$0xff]
        %v301 = vld [vmem:[%s196 + $0xd0] sm:$0xff]
        %v302 = vld [vmem:[%s196 + $0xd8] sm:$0xff]
        %v303 = vld [vmem:[%s196 + $0xe0] sm:$0xff]
        %v304 = vld [vmem:[%s196 + $0xe8] sm:$0xff]
        %v305 = vld [vmem:[%s196 + $0xf0] sm:$0xff]
        %v306 = vld [vmem:[%s196 + $0xf8] sm:$0xff]
        %v307 = vpack.c.bf16 %v260, %v259
        %v308 = vpack.c.bf16 %v262, %v261
        %v309 = vpack.c.bf16 %v264, %v263
        %v310 = vpack.c.bf16 %v266, %v265
        %v311 = vpack.c.bf16 %v268, %v267
        %v312 = vpack.c.bf16 %v270, %v269
        %v313 = vpack.c.bf16 %v272, %v271
        %v314 = vpack.c.bf16 %v274, %v273
        %v315 = vpack.c.bf16 %v277, %v275
        %v316 = vpack.c.bf16 %v278, %v276
        %v317 = vpack.c.bf16 %v281, %v279
        %v318 = vpack.c.bf16 %v282, %v280
        %v319 = vpack.c.bf16 %v285, %v283
        %v320 = vpack.c.bf16 %v286, %v284
        %v321 = vpack.c.bf16 %v289, %v287
        %v322 = vpack.c.bf16 %v290, %v288
        %v323 = vpack.c.bf16 %v293, %v291
        %v324 = vpack.c.bf16 %v294, %v292
        %v325 = vpack.c.bf16 %v297, %v295
        %v326 = vpack.c.bf16 %v298, %v296
        %v327 = vpack.c.bf16 %v301, %v299
        %v328 = vpack.c.bf16 %v302, %v300
        %v329 = vpack.c.bf16 %v305, %v303
        %v330 = vpack.c.bf16 %v306, %v304
        %v331 = vld [vmem:[#allocation2] sm:$0xff]
        %v332 = vld [vmem:[#allocation2 + $0x8] sm:$0xff]
        %v333 = vld [vmem:[#allocation2 + $0x10] sm:$0xff]
        %v334 = vld [vmem:[#allocation2 + $0x18] sm:$0xff]
        %v335 = vld [vmem:[#allocation2 + $0x20] sm:$0xff]
        %v336 = vld [vmem:[#allocation2 + $0x28] sm:$0xff]
        %v337 = vld [vmem:[#allocation2 + $0x30] sm:$0xff]
        %v338 = vld [vmem:[#allocation2 + $0x38] sm:$0xff]
        %v339 = vld [vmem:[#allocation2 + $0x40] sm:$0xff]
        %v340 = vld [vmem:[#allocation2 + $0x48] sm:$0xff]
        %v341 = vld [vmem:[#allocation2 + $0x50] sm:$0xff]
        %v342 = vld [vmem:[#allocation2 + $0x58] sm:$0xff]
        %v343 = vld [vmem:[#allocation2 + $0x60] sm:$0xff]
        %v344 = vld [vmem:[#allocation2 + $0x68] sm:$0xff]
        %v345 = vld [vmem:[#allocation2 + $0x70] sm:$0xff]
        %v346 = vld [vmem:[#allocation2 + $0x78] sm:$0xff]
        %v347 = vld [vmem:[#allocation2 + $0x80] sm:$0xff]
        %v348 = vld [vmem:[#allocation2 + $0x88] sm:$0xff]
        %v349 = vld [vmem:[#allocation2 + $0x90] sm:$0xff]
        %v350 = vld [vmem:[#allocation2 + $0x98] sm:$0xff]
        %v351 = vld [vmem:[#allocation2 + $0xa0] sm:$0xff]
        %v352 = vld [vmem:[#allocation2 + $0xa8] sm:$0xff]
        %v353 = vld [vmem:[#allocation2 + $0xb0] sm:$0xff]
        %v354 = vld [vmem:[#allocation2 + $0xb8] sm:$0xff]
        %v355 = vld [vmem:[#allocation2 + $0xc0] sm:$0xff]
        %v356 = vld [vmem:[#allocation2 + $0xc8] sm:$0xff]
        %v357 = vld [vmem:[#allocation2 + $0xd0] sm:$0xff]
        %v358 = vld [vmem:[#allocation2 + $0xd8] sm:$0xff]
        %v359 = vld [vmem:[#allocation2 + $0xe0] sm:$0xff]
        %v360 = vld [vmem:[#allocation2 + $0xe8] sm:$0xff]
        %v361 = vld [vmem:[#allocation2 + $0xf0] sm:$0xff]
        %v362 = vld [vmem:[#allocation2 + $0xf8] sm:$0xff]
        %363 = vmatpush.bf16.msra.mxu0 %v329
        %364 = vmatpush.bf16.msra.mxu0 %v327
        %365 = vmatpush.bf16.msra.mxu0 %v325
        %366 = vmatpush.bf16.msra.mxu0 %v323
        %367 = vmatpush.bf16.msra.mxu0 %v321
        %368 = vmatpush.bf16.msra.mxu0 %v319
        %369 = vmatpush.bf16.msra.mxu0 %v317
        %370 = vmatpush.bf16.msra.mxu0 %v315
        %371 = vmatmul.bf16.gmra.mxu0 %v307
        %v372 = vpop.f32.mrf.mxu0
        %v373 = vadd.f32 0.0, %v372
        %v374 = vpop.f32.mrf.mxu0
        %v375 = vadd.f32 0.0, %v374
        %376 = vmatmul.bf16.gmra.mxu0 %v308
        %v377 = vpop.f32.mrf.mxu0
        %v378 = vadd.f32 0.0, %v377
        %v379 = vpop.f32.mrf.mxu0
        %v380 = vadd.f32 0.0, %v379
        %381 = vmatmul.bf16.gmra.mxu0 %v309
        %v382 = vpop.f32.mrf.mxu0
        %v383 = vadd.f32 0.0, %v382
        %v384 = vpop.f32.mrf.mxu0
        %v385 = vadd.f32 0.0, %v384
        %386 = vmatmul.bf16.gmra.mxu0 %v310
        %v387 = vpop.f32.mrf.mxu0
        %v388 = vadd.f32 0.0, %v387
        %v389 = vpop.f32.mrf.mxu0
        %v390 = vadd.f32 0.0, %v389
        %391 = vmatmul.bf16.gmra.mxu0 %v311
        %v392 = vpop.f32.mrf.mxu0
        %v393 = vadd.f32 0.0, %v392
        %v394 = vpop.f32.mrf.mxu0
        %v395 = vadd.f32 0.0, %v394
        %396 = vmatmul.bf16.gmra.mxu0 %v312
        %v397 = vpop.f32.mrf.mxu0
        %v398 = vadd.f32 0.0, %v397
        %v399 = vpop.f32.mrf.mxu0
        %v400 = vadd.f32 0.0, %v399
        %401 = vmatmul.bf16.gmra.mxu0 %v313
        %v402 = vpop.f32.mrf.mxu0
        %v403 = vadd.f32 0.0, %v402
        %v404 = vpop.f32.mrf.mxu0
        %v405 = vadd.f32 0.0, %v404
        %406 = vmatmul.bf16.gmra.mxu0 %v314
        %v407 = vpop.f32.mrf.mxu0
        %v408 = vadd.f32 0.0, %v407
        %v409 = vpop.f32.mrf.mxu0
        %v410 = vadd.f32 0.0, %v409
        %411 = vdwg.mxu0
        %412 = vmatpush.bf16.msra.mxu0 %v330
        %413 = vmatpush.bf16.msra.mxu0 %v328
        %414 = vmatpush.bf16.msra.mxu0 %v326
        %415 = vmatpush.bf16.msra.mxu0 %v324
        %416 = vmatpush.bf16.msra.mxu0 %v322
        %417 = vmatpush.bf16.msra.mxu0 %v320
        %418 = vmatpush.bf16.msra.mxu0 %v318
        %419 = vmatpush.bf16.msra.mxu0 %v316
        %420 = vmatmul.bf16.gmra.mxu0 %v307
        %v421 = vpop.f32.mrf.mxu0
        %v422 = vadd.f32 0.0, %v421
        %v423 = vpop.f32.mrf.mxu0
        %v424 = vadd.f32 0.0, %v423
        %425 = vmatmul.bf16.gmra.mxu0 %v308
        %v426 = vpop.f32.mrf.mxu0
        %v427 = vadd.f32 0.0, %v426
        %v428 = vpop.f32.mrf.mxu0
        %v429 = vadd.f32 0.0, %v428
        %430 = vmatmul.bf16.gmra.mxu0 %v309
        %v431 = vpop.f32.mrf.mxu0
        %v432 = vadd.f32 0.0, %v431
        %v433 = vpop.f32.mrf.mxu0
        %v434 = vadd.f32 0.0, %v433
        %435 = vmatmul.bf16.gmra.mxu0 %v310
        %v436 = vpop.f32.mrf.mxu0
        %v437 = vadd.f32 0.0, %v436
        %v438 = vpop.f32.mrf.mxu0
        %v439 = vadd.f32 0.0, %v438
        %440 = vmatmul.bf16.gmra.mxu0 %v311
        %v441 = vpop.f32.mrf.mxu0
        %v442 = vadd.f32 0.0, %v441
        %v443 = vpop.f32.mrf.mxu0
        %v444 = vadd.f32 0.0, %v443
        %445 = vmatmul.bf16.gmra.mxu0 %v312
        %v446 = vpop.f32.mrf.mxu0
        %v447 = vadd.f32 0.0, %v446
        %v448 = vpop.f32.mrf.mxu0
        %v449 = vadd.f32 0.0, %v448
        %450 = vmatmul.bf16.gmra.mxu0 %v313
        %v451 = vpop.f32.mrf.mxu0
        %v452 = vadd.f32 0.0, %v451
        %v453 = vpop.f32.mrf.mxu0
        %v454 = vadd.f32 0.0, %v453
        %455 = vmatmul.bf16.gmra.mxu0 %v314
        %v456 = vpop.f32.mrf.mxu0
        %v457 = vadd.f32 0.0, %v456
        %v458 = vpop.f32.mrf.mxu0
        %v459 = vadd.f32 0.0, %v458
        %460 = vdwg.mxu0
        %v461 = vadd.f32 %v331, %v373
        %v462 = vadd.f32 %v332, %v422
        %v463 = vadd.f32 %v333, %v375
        %v464 = vadd.f32 %v334, %v424
        %v465 = vadd.f32 %v335, %v378
        %v466 = vadd.f32 %v336, %v427
        %v467 = vadd.f32 %v337, %v380
        %v468 = vadd.f32 %v338, %v429
        %v469 = vadd.f32 %v339, %v383
        %v470 = vadd.f32 %v340, %v432
        %v471 = vadd.f32 %v341, %v385
        %v472 = vadd.f32 %v342, %v434
        %v473 = vadd.f32 %v343, %v388
        %v474 = vadd.f32 %v344, %v437
        %v475 = vadd.f32 %v345, %v390
        %v476 = vadd.f32 %v346, %v439
        %v477 = vadd.f32 %v347, %v393
        %v478 = vadd.f32 %v348, %v442
        %v479 = vadd.f32 %v349, %v395
        %v480 = vadd.f32 %v350, %v444
        %v481 = vadd.f32 %v351, %v398
        %v482 = vadd.f32 %v352, %v447
        %v483 = vadd.f32 %v353, %v400
        %v484 = vadd.f32 %v354, %v449
        %v485 = vadd.f32 %v355, %v403
        %v486 = vadd.f32 %v356, %v452
        %v487 = vadd.f32 %v357, %v405
        %v488 = vadd.f32 %v358, %v454
        %v489 = vadd.f32 %v359, %v408
        %v490 = vadd.f32 %v360, %v457
        %v491 = vadd.f32 %v361, %v410
        %v492 = vadd.f32 %v362, %v459
        %493 = vst [vmem:[#allocation2] sm:$0xff] %v461
        %494 = vst [vmem:[#allocation2 + $0x8] sm:$0xff] %v462
        %495 = vst [vmem:[#allocation2 + $0x10] sm:$0xff] %v463
        %496 = vst [vmem:[#allocation2 + $0x18] sm:$0xff] %v464
        %497 = vst [vmem:[#allocation2 + $0x20] sm:$0xff] %v465
        %498 = vst [vmem:[#allocation2 + $0x28] sm:$0xff] %v466
        %499 = vst [vmem:[#allocation2 + $0x30] sm:$0xff] %v467
        %500 = vst [vmem:[#allocation2 + $0x38] sm:$0xff] %v468
        %501 = vst [vmem:[#allocation2 + $0x40] sm:$0xff] %v469
        %502 = vst [vmem:[#allocation2 + $0x48] sm:$0xff] %v470
        %503 = vst [vmem:[#allocation2 + $0x50] sm:$0xff] %v471
        %504 = vst [vmem:[#allocation2 + $0x58] sm:$0xff] %v472
        %505 = vst [vmem:[#allocation2 + $0x60] sm:$0xff] %v473
        %506 = vst [vmem:[#allocation2 + $0x68] sm:$0xff] %v474
        %507 = vst [vmem:[#allocation2 + $0x70] sm:$0xff] %v475
        %508 = vst [vmem:[#allocation2 + $0x78] sm:$0xff] %v476
        %509 = vst [vmem:[#allocation2 + $0x80] sm:$0xff] %v477
        %510 = vst [vmem:[#allocation2 + $0x88] sm:$0xff] %v478
        %511 = vst [vmem:[#allocation2 + $0x90] sm:$0xff] %v479
        %512 = vst [vmem:[#allocation2 + $0x98] sm:$0xff] %v480
        %513 = vst [vmem:[#allocation2 + $0xa0] sm:$0xff] %v481
        %514 = vst [vmem:[#allocation2 + $0xa8] sm:$0xff] %v482
        %515 = vst [vmem:[#allocation2 + $0xb0] sm:$0xff] %v483
        %516 = vst [vmem:[#allocation2 + $0xb8] sm:$0xff] %v484
        %517 = vst [vmem:[#allocation2 + $0xc0] sm:$0xff] %v485
        %518 = vst [vmem:[#allocation2 + $0xc8] sm:$0xff] %v486
        %519 = vst [vmem:[#allocation2 + $0xd0] sm:$0xff] %v487
        %520 = vst [vmem:[#allocation2 + $0xd8] sm:$0xff] %v488
        %521 = vst [vmem:[#allocation2 + $0xe0] sm:$0xff] %v489
        %522 = vst [vmem:[#allocation2 + $0xe8] sm:$0xff] %v490
        %523 = vst [vmem:[#allocation2 + $0xf0] sm:$0xff] %v491
        %524 = vst [vmem:[#allocation2 + $0xf8] sm:$0xff] %v492
        // Predicated region
        $region41: #{tpu_custom_call.1} parent=27 // pred_check
          %p525 = pneg %p223
        $region42: #{tpu_custom_call.1} parent=27 // pred_check_branch
          %527 = sbr.rel (%p525) target = $region44
        $region43: #{tpu_custom_call.1} parent=27 // pred_region
          %v528 = vld [vmem:[#allocation2] sm:$0xff]
          %v529 = vld [vmem:[#allocation2 + $0x8] sm:$0xff]
          %v530 = vld [vmem:[#allocation2 + $0x10] sm:$0xff]
          %v531 = vld [vmem:[#allocation2 + $0x18] sm:$0xff]
          %v532 = vld [vmem:[#allocation2 + $0x20] sm:$0xff]
          %v533 = vld [vmem:[#allocation2 + $0x28] sm:$0xff]
          %v534 = vld [vmem:[#allocation2 + $0x30] sm:$0xff]
          %v535 = vld [vmem:[#allocation2 + $0x38] sm:$0xff]
          %v536 = vld [vmem:[#allocation2 + $0x40] sm:$0xff]
          %v537 = vld [vmem:[#allocation2 + $0x48] sm:$0xff]
          %v538 = vld [vmem:[#allocation2 + $0x50] sm:$0xff]
          %v539 = vld [vmem:[#allocation2 + $0x58] sm:$0xff]
          %v540 = vld [vmem:[#allocation2 + $0x60] sm:$0xff]
          %v541 = vld [vmem:[#allocation2 + $0x68] sm:$0xff]
          %v542 = vld [vmem:[#allocation2 + $0x70] sm:$0xff]
          %v543 = vld [vmem:[#allocation2 + $0x78] sm:$0xff]
          %v544 = vld [vmem:[#allocation2 + $0x80] sm:$0xff]
          %v545 = vld [vmem:[#allocation2 + $0x88] sm:$0xff]
          %v546 = vld [vmem:[#allocation2 + $0x90] sm:$0xff]
          %v547 = vld [vmem:[#allocation2 + $0x98] sm:$0xff]
          %v548 = vld [vmem:[#allocation2 + $0xa0] sm:$0xff]
          %v549 = vld [vmem:[#allocation2 + $0xa8] sm:$0xff]
          %v550 = vld [vmem:[#allocation2 + $0xb0] sm:$0xff]
          %v551 = vld [vmem:[#allocation2 + $0xb8] sm:$0xff]
          %v552 = vld [vmem:[#allocation2 + $0xc0] sm:$0xff]
          %v553 = vld [vmem:[#allocation2 + $0xc8] sm:$0xff]
          %v554 = vld [vmem:[#allocation2 + $0xd0] sm:$0xff]
          %v555 = vld [vmem:[#allocation2 + $0xd8] sm:$0xff]
          %v556 = vld [vmem:[#allocation2 + $0xe0] sm:$0xff]
          %v557 = vld [vmem:[#allocation2 + $0xe8] sm:$0xff]
          %v558 = vld [vmem:[#allocation2 + $0xf0] sm:$0xff]
          %v559 = vld [vmem:[#allocation2 + $0xf8] sm:$0xff]
          %v560 = vpack.c.bf16 %v529, %v528
          %v561 = vpack.c.bf16 %v531, %v530
          %v562 = vpack.c.bf16 %v533, %v532
          %v563 = vpack.c.bf16 %v535, %v534
          %v564 = vpack.c.bf16 %v537, %v536
          %v565 = vpack.c.bf16 %v539, %v538
          %v566 = vpack.c.bf16 %v541, %v540
          %v567 = vpack.c.bf16 %v543, %v542
          %v568 = vpack.c.bf16 %v545, %v544
          %v569 = vpack.c.bf16 %v547, %v546
          %v570 = vpack.c.bf16 %v549, %v548
          %v571 = vpack.c.bf16 %v551, %v550
          %v572 = vpack.c.bf16 %v553, %v552
          %v573 = vpack.c.bf16 %v555, %v554
          %v574 = vpack.c.bf16 %v557, %v556
          %v575 = vpack.c.bf16 %v559, %v558
          %576 = vst [vmem:[%s217] sm:$0xff] %v560
          %577 = vst [vmem:[%s217 + $0x8] sm:$0xff] %v561
          %578 = vst [vmem:[%s217 + $0x10] sm:$0xff] %v562
          %579 = vst [vmem:[%s217 + $0x18] sm:$0xff] %v563
          %580 = vst [vmem:[%s217 + $0x20] sm:$0xff] %v564
          %581 = vst [vmem:[%s217 + $0x28] sm:$0xff] %v565
          %582 = vst [vmem:[%s217 + $0x30] sm:$0xff] %v566
          %583 = vst [vmem:[%s217 + $0x38] sm:$0xff] %v567
          %584 = vst [vmem:[%s217 + $0x40] sm:$0xff] %v568
          %585 = vst [vmem:[%s217 + $0x48] sm:$0xff] %v569
          %586 = vst [vmem:[%s217 + $0x50] sm:$0xff] %v570
          %587 = vst [vmem:[%s217 + $0x58] sm:$0xff] %v571
          %588 = vst [vmem:[%s217 + $0x60] sm:$0xff] %v572
          %589 = vst [vmem:[%s217 + $0x68] sm:$0xff] %v573
          %590 = vst [vmem:[%s217 + $0x70] sm:$0xff] %v574
          %591 = vst [vmem:[%s217 + $0x78] sm:$0xff] %v575
        $region44: #{tpu_custom_call.1} parent=27 // pred_fallthru
          _
        %s592 = sand.u32 %s105, 1
        %s593 = scalar_lea.sflag [#allocation5], %s592
        %s594 = sand.u32 %s105, 1
        %s595 = smul.addr %s594, 128
        %s596 = scalar_lea.vmem [#allocation8], %s595
        // Predicated region
        $region45: #{tpu_custom_call.1} parent=27 // pred_check
          %p597 = pneg %p115
        $region46: #{tpu_custom_call.1} parent=27 // pred_check_branch
          %599 = sbr.rel (%p597) target = $region48
        $region47: #{tpu_custom_call.1} parent=27 // pred_region
          %s600 = smul.u32 16, %s25
          %s601 = smul.u32 2, %s26
          %603 = vsyncadd %s593, 0
          %s604 = smul.addr %s600, 8
          %s605 = sadd.s32 %s601, %s604
          %s606 = smul.addr %s605, 4
          %s607 = scalar_lea.hbm %s2, %s606
          %s608 = sshll.u32 %s596, 4
          %s609 = int_to_ptr.vmem [resolvable:$true] %s608
          %s610 = sshll.u32 %s607, 4
          %s611 = int_to_ptr.hbm [resolvable:$true] %s610
          %616 = dma.vmem_to_hbm [thread:$0]  %s609, 2048, %s611, %s593, 128, 512, 8
        $region48: #{tpu_custom_call.1} parent=27 // pred_fallthru
          _
      $region28: #{tpu_custom_call.1} parent=5 // pred_fallthru
        _
      %p617 = scmp.le.s32.totalorder 2, %s15
      // Predicated region
      $region49: #{tpu_custom_call.1} parent=5 // pred_check
        %p618 = pneg %p617
      $region50: #{tpu_custom_call.1} parent=5 // pred_check_branch
        %620 = sbr.rel (%p618) target = $region52
      $region51: #{tpu_custom_call.1} parent=5 // pred_region
        %s621 = ssub.s32 %s15, 2
        // Predicated region
        $region53: #{tpu_custom_call.1} parent=51 // pred_check
          %p622 = pneg %p121
        $region54: #{tpu_custom_call.1} parent=51 // pred_check_branch
          %624 = sbr.rel (%p622) target = $region56
        $region55: #{tpu_custom_call.1} parent=51 // pred_region
          %s625 = sand.u32 %s106, 1
          %s626 = scalar_lea.sflag [#allocation5], %s625
          %s627 = sand.u32 %s106, 1
          %s628 = smul.addr %s627, 128
          %s629 = scalar_lea.vmem [#allocation8], %s628
          %631 = dma.done %s626, 2048
        $region56: #{tpu_custom_call.1} parent=51 // pred_fallthru
          _
      $region52: #{tpu_custom_call.1} parent=5 // pred_fallthru
        _
    $region6: #{tpu_custom_call.1} parent=1 // loop_footer
      %s19 = sadd.s32 1, %s15
    $region7: #{tpu_custom_call.1} parent=1 // loop_footer_branch
      %14 = sbr.rel target = $region3
    $region8: #{tpu_custom_call.1} parent=1 // loop_exit
      _
    %632 = vsyncpa [#allocation4], 1
    %s633 = scalar_lea.sflag [#allocation4], 1
    %634 = vsyncpa %s633, 1
    %635 = vsyncpa [#allocation7], 1
    %s636 = scalar_lea.sflag [#allocation7], 1
    %637 = vsyncpa %s636, 1
    %638 = vsyncpa [#allocation5], 1
    %s639 = scalar_lea.sflag [#allocation5], 1
    %640 = vsyncpa %s639, 1

</llo_original>
